<compile_context>
chip_gen: v6e
topology: v6e:2x2x1
jax: 0.10.0
libtpu: 0.0.40
codegen_flags: <defaults>
</compile_context>

<pallas_src>
import jax
import jax.numpy as jnp
from jax.experimental import pallas as pl
from jax.experimental.pallas import tpu as pltpu


def _round_up(n, m):
    return ((n + m - 1) // m) * m


def autoencoder_kernel(x_ref, noise_ref, w1_ref, b1_ref, w2_ref, b2_ref,
                       out_ref, mu_ref):
    """Feature-major tile:
         x_ref     [inputdim, TILE_B]   (VMEM, tiled over batch)
         noise_ref [dim,      TILE_B]   (VMEM, tiled over batch)
         w1_ref    [dim, inputdim]      (VMEM, resident)
         b1_ref    [dim, 1]             (VMEM, resident)
         w2_ref    [1, dim]             (VMEM, resident)
         b2_ref    [1, 1]               (SMEM scalar)
         out_ref   [1,   TILE_B]        mu_ref [dim, TILE_B]
    """
    # e1: mu_T = W1 @ x_T + b1   (MXU, f32 accumulation, lane-dense output)
    mu_t = jnp.dot(w1_ref[...], x_ref[...],
                   preferred_element_type=jnp.float32) + b1_ref[...]
    mu_ref[...] = mu_t.astype(mu_ref.dtype)

    # intermed = mu + N(0, 1)
    intermed_t = mu_t + noise_ref[...]

    # output_layer: out_T = w2_row @ intermed_T + b2   (stays lane-dense)
    out_t = jnp.dot(w2_ref[...], intermed_t,
                    preferred_element_type=jnp.float32) + b2_ref[0, 0]
    out_ref[...] = out_t.astype(out_ref.dtype)


def autoencoder_forward(x, w1, b1, w2, b2, *, noise=None, key=None,
                        tile_b=512):
    """x: [B, inputdim]; w1: [dim, inputdim]; b1: [dim];
       w2: [1, dim]; b2: [1].
       noise: optional [B, dim] standard-normal draws (== randn_like(mu));
       if None it is generated from `key` (default PRNGKey(0)).
       Returns (out [B, 1], mu [B, dim])."""
    B, inputdim = x.shape
    dim = w1.shape[0]

    # Batch goes on the lane axis: pad to a multiple of the (128-aligned) tile.
    tile_b = min(tile_b, _round_up(B, 128))
    b_pad = _round_up(B, tile_b)
    grid = (b_pad // tile_b,)

    # Wrapper-side layout glue (pure XLA): feature-major, padded batch.
    x_t = jnp.zeros((inputdim, b_pad), jnp.float32).at[:, :B].set(
        x.astype(jnp.float32).T)
    if noise is None:
        if key is None:
            key = jax.random.PRNGKey(0)
        noise_t = jax.random.normal(key, (dim, b_pad), dtype=jnp.float32)
    else:
        noise_t = jnp.zeros((dim, b_pad), jnp.float32).at[:, :B].set(
            noise.astype(jnp.float32).T)

    w1_f = w1.astype(jnp.float32)                    # [dim, inputdim] as-is
    b1_c = b1.astype(jnp.float32).reshape(dim, 1)    # column bias
    w2_f = w2.astype(jnp.float32)                    # [1, dim] as-is
    b2_s = b2.astype(jnp.float32).reshape(1, 1)      # scalar in SMEM

    out_t, mu_t = pl.pallas_call(
        autoencoder_kernel,
        out_shape=(
            jax.ShapeDtypeStruct((1, b_pad), jnp.float32),     # out_T
            jax.ShapeDtypeStruct((dim, b_pad), jnp.float32),   # mu_T
        ),
        grid_spec=pltpu.PrefetchScalarGridSpec(
            num_scalar_prefetch=0,
            grid=grid,
            in_specs=[
                # streamed over batch tiles (auto double-buffered DMA)
                pl.BlockSpec((inputdim, tile_b), lambda i: (0, i)),
                pl.BlockSpec((dim, tile_b), lambda i: (0, i)),
                # resident weights / biases (constant block index)
                pl.BlockSpec((dim, inputdim), lambda i: (0, 0)),
                pl.BlockSpec((dim, 1), lambda i: (0, 0)),
                pl.BlockSpec((1, dim), lambda i: (0, 0)),
                pl.BlockSpec((1, 1), lambda i: (0, 0),
                             memory_space=pltpu.MemorySpace.SMEM),
            ],
            out_specs=(
                pl.BlockSpec((1, tile_b), lambda i: (0, i)),
                pl.BlockSpec((dim, tile_b), lambda i: (0, i)),
            ),
        ),
        compiler_params=pltpu.CompilerParams(
            dimension_semantics=("parallel",)),
    )(x_t, noise_t, w1_f, b1_c, w2_f, b2_s)

    # Back to the PyTorch row-major layout; drop batch padding.
    out = out_t.T[:B]    # [B, 1]
    mu = mu_t.T[:B]      # [B, dim]
    return out, mu


if __name__ == "__main__":
    # Small shapes consistent with the module: inputdim features, args.dim
    # hidden.  B is chosen non-multiple-of-128 to exercise padding + a
    # multi-step batch grid (tile_b=128 -> grid of 3).
    B, INPUTDIM, DIM = 300, 16, 32

    key = jax.random.PRNGKey(0)
    kx, kw1, kb1, kw2, kb2, kn = jax.random.split(key, 6)

    x = jax.random.normal(kx, (B, INPUTDIM), dtype=jnp.float32)
    # Deterministic "Linear" parameter init (PyTorch layout: [out, in]).
    w1 = jax.random.uniform(kw1, (DIM, INPUTDIM), dtype=jnp.float32,
                            minval=-1.0 / INPUTDIM ** 0.5,
                            maxval=1.0 / INPUTDIM ** 0.5)
    b1 = jax.random.uniform(kb1, (DIM,), dtype=jnp.float32,
                            minval=-1.0 / INPUTDIM ** 0.5,
                            maxval=1.0 / INPUTDIM ** 0.5)
    w2 = jax.random.uniform(kw2, (1, DIM), dtype=jnp.float32,
                            minval=-1.0 / DIM ** 0.5,
                            maxval=1.0 / DIM ** 0.5)
    b2 = jax.random.uniform(kb2, (1,), dtype=jnp.float32,
                            minval=-1.0 / DIM ** 0.5,
                            maxval=1.0 / DIM ** 0.5)
    # Explicit noise so the full forward (including `out`) can be checked.
    noise = jax.random.normal(kn, (B, DIM), dtype=jnp.float32)

    out, mu = autoencoder_forward(x, w1, b1, w2, b2, noise=noise, tile_b=128)
    jax.block_until_ready((out, mu))

    # Pure-JAX reference of the PyTorch forward.
    mu_ref = x @ w1.T + b1
    out_ref = (mu_ref + noise) @ w2.T + b2

    assert mu.shape == (B, DIM) and out.shape == (B, 1)
    assert jnp.allclose(mu, mu_ref, atol=2e-3, rtol=2e-3)
    assert jnp.allclose(out, out_ref, atol=2e-3, rtol=2e-3)
    assert bool(jnp.all(jnp.isfinite(out)))

    print("KERNEL_OK")
</pallas_src>

<mosaic_0001>
module attributes {stable_mosaic.version = 11 : i64} {
  func.func @autoencoder_kernel(%arg0: i32, %arg1: memref<16x128xf32, #tpu.memory_space<vmem>>, %arg2: memref<32x128xf32, #tpu.memory_space<vmem>>, %arg3: memref<32x16xf32, #tpu.memory_space<vmem>>, %arg4: memref<32x1xf32, #tpu.memory_space<vmem>>, %arg5: memref<1x32xf32, #tpu.memory_space<vmem>>, %arg6: memref<1x1xf32, #tpu.memory_space<smem>>, %arg7: memref<1x128xf32, #tpu.memory_space<vmem>>, %arg8: memref<32x128xf32, #tpu.memory_space<vmem>>) attributes {dimension_semantics = [#tpu.dimension_semantics<parallel>], iteration_bounds = array<i64: 3>, scalar_prefetch = 0 : i64, scratch_operands = 0 : i64, tpu.core_type = #tpu.core_type<tc>, window_params = [{transform_indices = @transform_0, window_bounds = array<i64: 16, 128>}, {transform_indices = @transform_1, window_bounds = array<i64: 32, 128>}, {pipeline_mode = #tpu.pipeline_mode<synchronous>, transform_indices = @transform_2, window_bounds = array<i64: 32, 16>}, {pipeline_mode = #tpu.pipeline_mode<synchronous>, transform_indices = @transform_3, window_bounds = array<i64: 32, 1>}, {pipeline_mode = #tpu.pipeline_mode<synchronous>, transform_indices = @transform_4, window_bounds = array<i64: 1, 32>}, {transform_indices = @transform_5, window_bounds = array<i64: 1, 1>}, {transform_indices = @transform_6, window_bounds = array<i64: 1, 128>}, {transform_indices = @transform_7, window_bounds = array<i64: 32, 128>}]} {
    %c0 = arith.constant 0 : index
    %c0_0 = arith.constant 0 : index
    %0 = vector.load %arg3[%c0, %c0_0] : memref<32x16xf32, #tpu.memory_space<vmem>>, vector<32x16xf32>
    %c0_1 = arith.constant 0 : index
    %c0_2 = arith.constant 0 : index
    %1 = vector.load %arg1[%c0_1, %c0_2] : memref<16x128xf32, #tpu.memory_space<vmem>>, vector<16x128xf32>
    %cst = arith.constant dense<0.000000e+00> : vector<32x128xf32>
    %2 = tpu.matmul %0, %1, %cst {dimension_numbers = #tpu.dot_dimension_numbers<[1], [0], [0], [1], [0, 0, 1, 1], [], []>} : vector<32x16xf32>, vector<16x128xf32>, vector<32x128xf32> -> vector<32x128xf32>
    %c0_3 = arith.constant 0 : index
    %c0_4 = arith.constant 0 : index
    %3 = vector.load %arg4[%c0_3, %c0_4] : memref<32x1xf32, #tpu.memory_space<vmem>>, vector<32x1xf32>
    %4 = vector.broadcast %3 : vector<32x1xf32> to vector<32x128xf32>
    %5 = arith.addf %2, %4 : vector<32x128xf32>
    %c0_5 = arith.constant 0 : index
    %c0_6 = arith.constant 0 : index
    %6 = vector.load %arg8[%c0_5, %c0_6] : memref<32x128xf32, #tpu.memory_space<vmem>>, vector<32x128xf32>
    tpu.vector_store %arg8[%c0_5, %c0_6], %5 {strides = array<i32>} : memref<32x128xf32, #tpu.memory_space<vmem>>, vector<32x128xf32>,
    %c0_7 = arith.constant 0 : index
    %c0_8 = arith.constant 0 : index
    %7 = vector.load %arg2[%c0_7, %c0_8] : memref<32x128xf32, #tpu.memory_space<vmem>>, vector<32x128xf32>
    %8 = arith.addf %5, %7 : vector<32x128xf32>
    %c0_9 = arith.constant 0 : index
    %c0_10 = arith.constant 0 : index
    %9 = vector.load %arg5[%c0_9, %c0_10] : memref<1x32xf32, #tpu.memory_space<vmem>>, vector<1x32xf32>
    %cst_11 = arith.constant dense<0.000000e+00> : vector<1x128xf32>
    %10 = tpu.matmul %9, %8, %cst_11 {dimension_numbers = #tpu.dot_dimension_numbers<[1], [0], [0], [1], [0, 0, 1, 1], [], []>} : vector<1x32xf32>, vector<32x128xf32>, vector<1x128xf32> -> vector<1x128xf32>
    %c0_12 = arith.constant 0 : index
    %c0_13 = arith.constant 0 : index
    %11 = memref.load %arg6[%c0_12, %c0_13] : memref<1x1xf32, #tpu.memory_space<smem>>
    %12 = vector.broadcast %11 : f32 to vector<1x128xf32>
    %13 = arith.addf %10, %12 : vector<1x128xf32>
    %c0_14 = arith.constant 0 : index
    %c0_15 = arith.constant 0 : index
    %14 = vector.load %arg7[%c0_14, %c0_15] : memref<1x128xf32, #tpu.memory_space<vmem>>, vector<1x128xf32>
    tpu.vector_store %arg7[%c0_14, %c0_15], %13 {strides = array<i32>} : memref<1x128xf32, #tpu.memory_space<vmem>>, vector<1x128xf32>,
    return
  }
  func.func @transform_0(%arg0: i32) -> (i32, i32) {
    %c0_i32 = arith.constant 0 : i32
    %c0_i32_0 = arith.constant 0 : i32
    return %c0_i32, %arg0 : i32, i32
  }
  func.func @transform_1(%arg0: i32) -> (i32, i32) {
    %c0_i32 = arith.constant 0 : i32
    %c0_i32_0 = arith.constant 0 : i32
    return %c0_i32, %arg0 : i32, i32
  }
  func.func @transform_2(%arg0: i32) -> (i32, i32) {
    %c0_i32 = arith.constant 0 : i32
    %c0_i32_0 = arith.constant 0 : i32
    %c0_i32_1 = arith.constant 0 : i32
    return %c0_i32, %c0_i32_0 : i32, i32
  }
  func.func @transform_3(%arg0: i32) -> (i32, i32) {
    %c0_i32 = arith.constant 0 : i32
    %c0_i32_0 = arith.constant 0 : i32
    %c0_i32_1 = arith.constant 0 : i32
    return %c0_i32, %c0_i32_0 : i32, i32
  }
  func.func @transform_4(%arg0: i32) -> (i32, i32) {
    %c0_i32 = arith.constant 0 : i32
    %c0_i32_0 = arith.constant 0 : i32
    %c0_i32_1 = arith.constant 0 : i32
    return %c0_i32, %c0_i32_0 : i32, i32
  }
  func.func @transform_5(%arg0: i32) -> (i32, i32) {
    %c0_i32 = arith.constant 0 : i32
    %c0_i32_0 = arith.constant 0 : i32
    %c0_i32_1 = arith.constant 0 : i32
    return %c0_i32, %c0_i32_0 : i32, i32
  }
  func.func @transform_6(%arg0: i32) -> (i32, i32) {
    %c0_i32 = arith.constant 0 : i32
    %c0_i32_0 = arith.constant 0 : i32
    return %c0_i32, %arg0 : i32, i32
  }
  func.func @transform_7(%arg0: i32) -> (i32, i32) {
    %c0_i32 = arith.constant 0 : i32
    %c0_i32_0 = arith.constant 0 : i32
    return %c0_i32, %arg0 : i32, i32
  }
}

</mosaic_0001>

<llo_original>
// kernel: tpu_custom_call.1
$region0: #{tpu_custom_call.1}
  #allocation0 [shape = 'u32[]', space=smem, size = 0x4, offset = 0x4, fixed_abs, tag = 'smem constant byte address 0x4 - core index']
  #allocation1 [shape = 'u32[144,128]{1,0:T(1,128)}', space=vmem, size = 0x12000, scoped, tag = 'internal scratch']
  #allocation2 [shape = 'f32[1,1]{1,0:T(1,128)S(6)}', space=smem, size = 0x200, scoped, tag = 'scoped memory for tpu_custom_call.1']
  %s0 = inlined_call_operand.vmem [shape: f32[16,384], index: 0, kind: input, shape index: {}]
  %s1 = inlined_call_operand.hbm [shape: f32[32,384], index: 1, kind: input, shape index: {}]
  %s2 = inlined_call_operand.vmem [shape: f32[32,16], index: 2, kind: input, shape index: {}]
  %s3 = inlined_call_operand.vmem [shape: f32[32,1], index: 3, kind: input, shape index: {}]
  %s4 = inlined_call_operand.vmem [shape: f32[1,32], index: 4, kind: input, shape index: {}]
  %s5 = inlined_call_operand.<no memory space> [shape: f32[1,1], index: 5, kind: input, shape index: {}]
  %s6 = inlined_call_operand.hbm [shape: f32[1,384], index: 6, kind: output, shape index: {0}]
  %s7 = inlined_call_operand.hbm [shape: f32[32,384], index: 7, kind: output, shape index: {1}]
  %8 = xla_tuple %s6, %s7
  %s9 = sld [smem:[#allocation0]]
  $region107: #{tpu_custom_call.1} parent=0
    _
  %s11 = ssub.s32 1, %s9
  %s12 = scalar_select 0, %s11, %s9
  %13 = sst [smem:[#allocation2]] %s5
  $region1: #{tpu_custom_call.1} parent=0
    #allocation3 [shape = 'u8[16384]{0}', space=vmem, size = 0x4000, scoped, tag = 'input window, operand 0']
    #allocation4 [shape = 'u8[32768]{0}', space=vmem, size = 0x8000, scoped, tag = 'input window, operand 1']
    #allocation5 [shape = 's32[2]{0}', space=sflag, size = 0x8, scoped, tag = 'scoped memory for tpu_custom_call.1']
    #allocation6 [shape = 's32[2]{0}', space=sflag, size = 0x8, scoped, tag = 'scoped memory for tpu_custom_call.1']
    #allocation7 [shape = 'u8[1024]{0}', space=vmem, size = 0x400, scoped, tag = 'output window, operand 0']
    #allocation8 [shape = 'u8[32768]{0}', space=vmem, size = 0x8000, scoped, tag = 'output window, operand 1']
    #allocation9 [shape = 's32[2]{0}', space=sflag, size = 0x8, scoped, tag = 'scoped memory for tpu_custom_call.1']
    %14 = vsyncpa [#allocation5], 0
    %s15 = scalar_lea.sflag [#allocation5], 1
    %16 = vsyncpa %s15, 0
    %17 = vsyncpa [#allocation6], 0
    %s18 = scalar_lea.sflag [#allocation6], 1
    %19 = vsyncpa %s18, 0
    %20 = vsyncpa [#allocation9], 0
    %s21 = scalar_lea.sflag [#allocation9], 1
    %22 = vsyncpa %s21, 0
    loop: start=0, step=1, limit=5
    $region2: #{tpu_custom_call.1} parent=1 // loop_pre_header
      _
    $region3: #{tpu_custom_call.1} parent=1 // loop_header
      %s24 = sphi 0, %s28
      %p25 = scmp.ge.s32.totalorder %s24, 5
      %s34 = sphi 0, %s36
      %s37 = sphi 0, %s34
      %s38 = sphi 0, %s37
      %s54 = sphi 0, %s38
      %s60 = sphi 0, %s62
      %s63 = sphi 0, %s60
      %s64 = sphi 0, %s63
      %s80 = sphi 0, %s64
      %s84 = sphi 0, %s84
      %s86 = sphi 0, %s84
      %s87 = sphi 0, %s86
      %s101 = sphi 0, %s87
      %s105 = sphi 0, %s105
      %s107 = sphi 0, %s105
      %s108 = sphi 0, %s107
      %s122 = sphi 0, %s108
      %s126 = sphi 0, %s126
      %s128 = sphi 0, %s126
      %s129 = sphi 0, %s128
      %s143 = sphi 0, %s129
      %s147 = sphi 0, %s147
      %s149 = sphi 0, %s147
      %s150 = sphi 0, %s149
      %s164 = sphi 0, %s150
      %s170 = sphi 0, %s172
      %s173 = sphi 0, %s170
      %s174 = sphi 0, %s173
      %s190 = sphi 0, %s174
      %s196 = sphi 0, %s198
      %s199 = sphi 0, %s196
      %s200 = sphi 0, %s199
      %s216 = sphi 0, %s200
    $region4: #{tpu_custom_call.1} parent=1 // loop_header_branch
      %27 = sbr.rel (%p25) target = $region8
    $region5: #{tpu_custom_call.1} parent=1 // loop_body
      %s29 = ssub.s32 %s24, 1
      %s30 = ssub.s32 %s24, 2
      %s31 = sadd.s32 %s24, 1
      %s32 = ssub.s32 %s24, %s31
      %p33 = scmp.eq.s32.totalorder %s32, 0
      %s35 = sadd.s32 %s34, 1
      %s36 = scalar_select %p33, %s34, %s35
      %p39 = pneg %p33
      %p40 = scmp.eq.s32.totalorder %s24, 2
      %p41 = por %p39, %p40
      %p42 = scmp.ne.s32.totalorder %s34, %s37
      %p43 = scmp.eq.s32.totalorder %s24, 0
      %p44 = por %p42, %p43
      %p45 = scmp.ne.s32.totalorder %s34, %s37
      %p46 = scmp.eq.s32.totalorder %s29, 2
      %p47 = por %p45, %p46
      %p48 = scmp.ne.s32.totalorder %s37, %s38
      %p49 = scmp.eq.s32.totalorder %s29, 0
      %p50 = por %p48, %p49
      %p51 = scmp.ne.s32.totalorder %s37, %s38
      %p52 = scmp.eq.s32.totalorder %s30, 2
      %p53 = por %p51, %p52
      %p55 = scmp.ne.s32.totalorder %s38, %s54
      %p56 = scmp.eq.s32.totalorder %s30, 0
      %p57 = por %p55, %p56
      %s58 = ssub.s32 %s24, %s31
      %p59 = scmp.eq.s32.totalorder %s58, 0
      %s61 = sadd.s32 %s60, 1
      %s62 = scalar_select %p59, %s60, %s61
      %p65 = pneg %p59
      %p66 = scmp.eq.s32.totalorder %s24, 2
      %p67 = por %p65, %p66
      %p68 = scmp.ne.s32.totalorder %s60, %s63
      %p69 = scmp.eq.s32.totalorder %s24, 0
      %p70 = por %p68, %p69
      %p71 = scmp.ne.s32.totalorder %s60, %s63
      %p72 = scmp.eq.s32.totalorder %s29, 2
      %p73 = por %p71, %p72
      %p74 = scmp.ne.s32.totalorder %s63, %s64
      %p75 = scmp.eq.s32.totalorder %s29, 0
      %p76 = por %p74, %p75
      %p77 = scmp.ne.s32.totalorder %s63, %s64
      %p78 = scmp.eq.s32.totalorder %s30, 2
      %p79 = por %p77, %p78
      %p81 = scmp.ne.s32.totalorder %s64, %s80
      %p82 = scmp.eq.s32.totalorder %s30, 0
      %p83 = por %p81, %p82
      %s85 = sadd.s32 %s84, 1
      %p88 = scmp.eq.s32.totalorder %s24, 2
      %p89 = scmp.ne.s32.totalorder %s84, %s86
      %p90 = scmp.eq.s32.totalorder %s24, 0
      %p91 = por %p89, %p90
      %p92 = scmp.ne.s32.totalorder %s84, %s86
      %p93 = scmp.eq.s32.totalorder %s29, 2
      %p94 = por %p92, %p93
      %p95 = scmp.ne.s32.totalorder %s86, %s87
      %p96 = scmp.eq.s32.totalorder %s29, 0
      %p97 = por %p95, %p96
      %p98 = scmp.ne.s32.totalorder %s86, %s87
      %p99 = scmp.eq.s32.totalorder %s30, 2
      %p100 = por %p98, %p99
      %p102 = scmp.ne.s32.totalorder %s87, %s101
      %p103 = scmp.eq.s32.totalorder %s30, 0
      %p104 = por %p102, %p103
      %s106 = sadd.s32 %s105, 1
      %p109 = scmp.eq.s32.totalorder %s24, 2
      %p110 = scmp.ne.s32.totalorder %s105, %s107
      %p111 = scmp.eq.s32.totalorder %s24, 0
      %p112 = por %p110, %p111
      %p113 = scmp.ne.s32.totalorder %s105, %s107
      %p114 = scmp.eq.s32.totalorder %s29, 2
      %p115 = por %p113, %p114
      %p116 = scmp.ne.s32.totalorder %s107, %s108
      %p117 = scmp.eq.s32.totalorder %s29, 0
      %p118 = por %p116, %p117
      %p119 = scmp.ne.s32.totalorder %s107, %s108
      %p120 = scmp.eq.s32.totalorder %s30, 2
      %p121 = por %p119, %p120
      %p123 = scmp.ne.s32.totalorder %s108, %s122
      %p124 = scmp.eq.s32.totalorder %s30, 0
      %p125 = por %p123, %p124
      %s127 = sadd.s32 %s126, 1
      %p130 = scmp.eq.s32.totalorder %s24, 2
      %p131 = scmp.ne.s32.totalorder %s126, %s128
      %p132 = scmp.eq.s32.totalorder %s24, 0
      %p133 = por %p131, %p132
      %p134 = scmp.ne.s32.totalorder %s126, %s128
      %p135 = scmp.eq.s32.totalorder %s29, 2
      %p136 = por %p134, %p135
      %p137 = scmp.ne.s32.totalorder %s128, %s129
      %p138 = scmp.eq.s32.totalorder %s29, 0
      %p139 = por %p137, %p138
      %p140 = scmp.ne.s32.totalorder %s128, %s129
      %p141 = scmp.eq.s32.totalorder %s30, 2
      %p142 = por %p140, %p141
      %p144 = scmp.ne.s32.totalorder %s129, %s143
      %p145 = scmp.eq.s32.totalorder %s30, 0
      %p146 = por %p144, %p145
      %s148 = sadd.s32 %s147, 1
      %p151 = scmp.eq.s32.totalorder %s24, 2
      %p152 = scmp.ne.s32.totalorder %s147, %s149
      %p153 = scmp.eq.s32.totalorder %s24, 0
      %p154 = por %p152, %p153
      %p155 = scmp.ne.s32.totalorder %s147, %s149
      %p156 = scmp.eq.s32.totalorder %s29, 2
      %p157 = por %p155, %p156
      %p158 = scmp.ne.s32.totalorder %s149, %s150
      %p159 = scmp.eq.s32.totalorder %s29, 0
      %p160 = por %p158, %p159
      %p161 = scmp.ne.s32.totalorder %s149, %s150
      %p162 = scmp.eq.s32.totalorder %s30, 2
      %p163 = por %p161, %p162
      %p165 = scmp.ne.s32.totalorder %s150, %s164
      %p166 = scmp.eq.s32.totalorder %s30, 0
      %p167 = por %p165, %p166
      %s168 = ssub.s32 %s24, %s31
      %p169 = scmp.eq.s32.totalorder %s168, 0
      %s171 = sadd.s32 %s170, 1
      %s172 = scalar_select %p169, %s170, %s171
      %p175 = pneg %p169
      %p176 = scmp.eq.s32.totalorder %s24, 2
      %p177 = por %p175, %p176
      %p178 = scmp.ne.s32.totalorder %s170, %s173
      %p179 = scmp.eq.s32.totalorder %s24, 0
      %p180 = por %p178, %p179
      %p181 = scmp.ne.s32.totalorder %s170, %s173
      %p182 = scmp.eq.s32.totalorder %s29, 2
      %p183 = por %p181, %p182
      %p184 = scmp.ne.s32.totalorder %s173, %s174
      %p185 = scmp.eq.s32.totalorder %s29, 0
      %p186 = por %p184, %p185
      %p187 = scmp.ne.s32.totalorder %s173, %s174
      %p188 = scmp.eq.s32.totalorder %s30, 2
      %p189 = por %p187, %p188
      %p191 = scmp.ne.s32.totalorder %s174, %s190
      %p192 = scmp.eq.s32.totalorder %s30, 0
      %p193 = por %p191, %p192
      %s194 = ssub.s32 %s24, %s31
      %p195 = scmp.eq.s32.totalorder %s194, 0
      %s197 = sadd.s32 %s196, 1
      %s198 = scalar_select %p195, %s196, %s197
      %p201 = pneg %p195
      %p202 = scmp.eq.s32.totalorder %s24, 2
      %p203 = por %p201, %p202
      %p204 = scmp.ne.s32.totalorder %s196, %s199
      %p205 = scmp.eq.s32.totalorder %s24, 0
      %p206 = por %p204, %p205
      %p207 = scmp.ne.s32.totalorder %s196, %s199
      %p208 = scmp.eq.s32.totalorder %s29, 2
      %p209 = por %p207, %p208
      %p210 = scmp.ne.s32.totalorder %s199, %s200
      %p211 = scmp.eq.s32.totalorder %s29, 0
      %p212 = por %p210, %p211
      %p213 = scmp.ne.s32.totalorder %s199, %s200
      %p214 = scmp.eq.s32.totalorder %s30, 2
      %p215 = por %p213, %p214
      %p217 = scmp.ne.s32.totalorder %s200, %s216
      %p218 = scmp.eq.s32.totalorder %s30, 0
      %p219 = por %p217, %p218
      %p220 = scmp.le.s32.totalorder 1, %s24
      %p221 = scmp.lt.s32.totalorder %s24, 4
      %p222 = pnand %p220, %p221
      %p223 = pneg %p222
      // Predicated region
      $region9: #{tpu_custom_call.1} parent=5 // pred_check
        _
      $region10: #{tpu_custom_call.1} parent=5 // pred_check_branch
        %225 = sbr.rel (%p222) target = $region12
      $region11: #{tpu_custom_call.1} parent=5 // pred_region
        %s226 = ssub.s32 %s24, 1
        // Predicated region
        $region13: #{tpu_custom_call.1} parent=11 // pred_check
          %p227 = pneg %p97
        $region14: #{tpu_custom_call.1} parent=11 // pred_check_branch
          %229 = sbr.rel (%p227) target = $region16
        $region15: #{tpu_custom_call.1} parent=11 // pred_region
          _
        $region16: #{tpu_custom_call.1} parent=11 // pred_fallthru
          _
        // Predicated region
        $region17: #{tpu_custom_call.1} parent=11 // pred_check
          %p230 = pneg %p118
        $region18: #{tpu_custom_call.1} parent=11 // pred_check_branch
          %232 = sbr.rel (%p230) target = $region20
        $region19: #{tpu_custom_call.1} parent=11 // pred_region
          _
        $region20: #{tpu_custom_call.1} parent=11 // pred_fallthru
          _
        // Predicated region
        $region21: #{tpu_custom_call.1} parent=11 // pred_check
          %p233 = pneg %p139
        $region22: #{tpu_custom_call.1} parent=11 // pred_check_branch
          %235 = sbr.rel (%p233) target = $region24
        $region23: #{tpu_custom_call.1} parent=11 // pred_region
          _
        $region24: #{tpu_custom_call.1} parent=11 // pred_fallthru
          _
        // Predicated region
        $region25: #{tpu_custom_call.1} parent=11 // pred_check
          %p236 = pneg %p160
        $region26: #{tpu_custom_call.1} parent=11 // pred_check_branch
          %238 = sbr.rel (%p236) target = $region28
        $region27: #{tpu_custom_call.1} parent=11 // pred_region
          _
        $region28: #{tpu_custom_call.1} parent=11 // pred_fallthru
          _
      $region12: #{tpu_custom_call.1} parent=5 // pred_fallthru
        _
      %p239 = scmp.lt.s32.totalorder %s24, 3
      // Predicated region
      $region29: #{tpu_custom_call.1} parent=5 // pred_check
        %p240 = pneg %p239
      $region30: #{tpu_custom_call.1} parent=5 // pred_check_branch
        %242 = sbr.rel (%p240) target = $region32
      $region31: #{tpu_custom_call.1} parent=5 // pred_region
        // Predicated region
        $region33: #{tpu_custom_call.1} parent=31 // pred_check
          %p243 = pneg %p44
        $region34: #{tpu_custom_call.1} parent=31 // pred_check_branch
          %245 = sbr.rel (%p243) target = $region36
        $region35: #{tpu_custom_call.1} parent=31 // pred_region
          %s246 = sand.u32 %s34, 1
          %s247 = sand.u32 %s34, 1
          %s248 = smul.addr %s247, 16
          %s249 = scalar_lea.vmem [#allocation3], %s248
          %s250 = smul.addr %s24, 8
          %s251 = scalar_lea.vmem %s0, %s250
          // Predicated region
          $region37: #{tpu_custom_call.1} parent=35 // pred_check
            _
          $region38: #{tpu_custom_call.1} parent=35 // pred_check_branch
            %253 = sbr.rel (0) target = $region40
          $region39: #{tpu_custom_call.1} parent=35 // pred_region
            // Predicated region
            $region41: #{tpu_custom_call.1} parent=39 // pred_check
              _
            $region42: #{tpu_custom_call.1} parent=39 // pred_check_branch
              %255 = sbr.rel (0) target = $region44
            $region43: #{tpu_custom_call.1} parent=39 // pred_region
              // Predicated region
              $region56: #{tpu_custom_call.1} parent=43 // pred_check
                _
              $region57: #{tpu_custom_call.1} parent=43 // pred_check_branch
                %273 = sbr.rel (0) target = $region59
              $region58: #{tpu_custom_call.1} parent=43 // pred_region
                loop: start=0, step=1, limit=1
                $region60: #{tpu_custom_call.1} parent=58 // loop_pre_header
                  _
                $region61: #{tpu_custom_call.1} parent=58 // loop_header
                  %s275 = sphi 0, %s279
                  %p276 = scmp.ge.s32.totalorder %s275, 1
                  %s280 = sphi %s251, %s251
                  %s281 = sphi %s249, %s249
                $region62: #{tpu_custom_call.1} parent=58 // loop_header_branch
                  %278 = sbr.rel (%p276) target = $region66
                $region63: #{tpu_custom_call.1} parent=58 // loop_body
                  %v282 = vld [vmem:[%s280] sm:$0xff]
                  %283 = vst [vmem:[%s281] sm:$0xff] %v282
                  %v284 = vld [vmem:[%s280 + $0x18] sm:$0xff]
                  %285 = vst [vmem:[%s281 + $0x8] sm:$0xff] %v284
                $region64: #{tpu_custom_call.1} parent=58 // loop_footer
                  %s279 = sadd.s32 1, %s275
                $region65: #{tpu_custom_call.1} parent=58 // loop_footer_branch
                  %274 = sbr.rel target = $region61
                $region66: #{tpu_custom_call.1} parent=58 // loop_exit
                  _
              $region59: #{tpu_custom_call.1} parent=43 // pred_fallthru
                _
              // Predicated region
              $region67: #{tpu_custom_call.1} parent=43 // pred_check
                _
              $region68: #{tpu_custom_call.1} parent=43 // pred_check_branch
                %287 = sbr.rel target = $region70
              $region69: #{tpu_custom_call.1} parent=43 // pred_region
                _
              $region70: #{tpu_custom_call.1} parent=43 // pred_fallthru
                _
            $region44: #{tpu_custom_call.1} parent=39 // pred_fallthru
              _
            // Predicated region
            $region45: #{tpu_custom_call.1} parent=39 // pred_check
              _
            $region46: #{tpu_custom_call.1} parent=39 // pred_check_branch
              %257 = sbr.rel target = $region48
            $region47: #{tpu_custom_call.1} parent=39 // pred_region
              %s259 = ssub.s32 256, 1
              loop: start=0, step=1, limit=1
              $region49: #{tpu_custom_call.1} parent=47 // loop_pre_header
                _
              $region50: #{tpu_custom_call.1} parent=47 // loop_header
                %s261 = sphi 0, %s265
                %p262 = scmp.ge.s32.totalorder %s261, 1
                %s266 = sphi %s251, %s251
                %s267 = sphi %s249, %s249
              $region51: #{tpu_custom_call.1} parent=47 // loop_header_branch
                %264 = sbr.rel (%p262) target = $region55
              $region52: #{tpu_custom_call.1} parent=47 // loop_body
                %v268 = vld [vmem:[%s266] sm:%s259]
                %269 = vst [vmem:[%s267] sm:%s259] %v268
                %v270 = vld [vmem:[%s266 + $0x18] sm:%s259]
                %271 = vst [vmem:[%s267 + $0x8] sm:%s259] %v270
              $region53: #{tpu_custom_call.1} parent=47 // loop_footer
                %s265 = sadd.s32 1, %s261
              $region54: #{tpu_custom_call.1} parent=47 // loop_footer_branch
                %260 = sbr.rel target = $region50
              $region55: #{tpu_custom_call.1} parent=47 // loop_exit
                _
            $region48: #{tpu_custom_call.1} parent=39 // pred_fallthru
              _
          $region40: #{tpu_custom_call.1} parent=35 // pred_fallthru
            _
          %288 = vnop
        $region36: #{tpu_custom_call.1} parent=31 // pred_fallthru
          _
        // Predicated region
        $region71: #{tpu_custom_call.1} parent=31 // pred_check
          %p289 = pneg %p70
        $region72: #{tpu_custom_call.1} parent=31 // pred_check_branch
          %291 = sbr.rel (%p289) target = $region74
        $region73: #{tpu_custom_call.1} parent=31 // pred_region
          %s292 = sand.u32 %s60, 1
          %s293 = scalar_lea.sflag [#allocation5], %s292
          %s294 = sand.u32 %s60, 1
          %s295 = smul.addr %s294, 32
          %s296 = scalar_lea.vmem [#allocation4], %s295
          %s298 = ssub.s32 512, 512
          %299 = vsyncadd %s293, %s298
          %s300 = smul.addr %s24, 128
          %s301 = scalar_lea.hbm %s1, %s300
          %s302 = sshll.u32 %s296, 4
          %s303 = int_to_ptr.vmem [resolvable:$true] %s302
          %308 = dma.hbm_to_vmem [thread:$0]  %s301, 512, %s303, %s293, 384, 128, 8
        $region74: #{tpu_custom_call.1} parent=31 // pred_fallthru
          _
      $region32: #{tpu_custom_call.1} parent=5 // pred_fallthru
        _
      %p309 = scmp.le.s32.totalorder 1, %s24
      %p310 = scmp.lt.s32.totalorder %s24, 4
      %p311 = pnand %p309, %p310
      %p312 = pneg %p311
      // Predicated region
      $region75: #{tpu_custom_call.1} parent=5 // pred_check
        _
      $region76: #{tpu_custom_call.1} parent=5 // pred_check_branch
        %314 = sbr.rel (%p311) target = $region78
      $region77: #{tpu_custom_call.1} parent=5 // pred_region
        %s315 = ssub.s32 %s24, 1
        %s316 = sand.u32 %s37, 1
        %s317 = sand.u32 %s37, 1
        %s318 = smul.addr %s317, 16
        %s319 = scalar_lea.vmem [#allocation3], %s318
        // Predicated region
        $region79: #{tpu_custom_call.1} parent=77 // pred_check
          %p320 = pneg %p50
        $region80: #{tpu_custom_call.1} parent=77 // pred_check_branch
          %322 = sbr.rel (%p320) target = $region82
        $region81: #{tpu_custom_call.1} parent=77 // pred_region
          _
        $region82: #{tpu_custom_call.1} parent=77 // pred_fallthru
          _
        %s323 = sand.u32 %s63, 1
        %s324 = scalar_lea.sflag [#allocation5], %s323
        %s325 = sand.u32 %s63, 1
        %s326 = smul.addr %s325, 32
        %s327 = scalar_lea.vmem [#allocation4], %s326
        // Predicated region
        $region83: #{tpu_custom_call.1} parent=77 // pred_check
          %p328 = pneg %p76
        $region84: #{tpu_custom_call.1} parent=77 // pred_check_branch
          %330 = sbr.rel (%p328) target = $region86
        $region85: #{tpu_custom_call.1} parent=77 // pred_region
          %331 = dma.done %s324, 512
        $region86: #{tpu_custom_call.1} parent=77 // pred_fallthru
          _
        %s332 = sand.u32 %s37, 1
        %s333 = sand.u32 %s37, 1
        %s334 = smul.addr %s333, 16
        %s335 = scalar_lea.vmem [#allocation3], %s334
        %p336 = pneg %p50
        %p337 = pneg %p47
        %s338 = sand.u32 %s63, 1
        %s339 = scalar_lea.sflag [#allocation5], %s338
        %s340 = sand.u32 %s63, 1
        %s341 = smul.addr %s340, 32
        %s342 = scalar_lea.vmem [#allocation4], %s341
        %p343 = pneg %p76
        %p344 = pneg %p73
        %p345 = pneg %p97
        %p346 = pneg %p94
        %p347 = pneg %p118
        %p348 = pneg %p115
        %p349 = pneg %p139
        %p350 = pneg %p136
        %p351 = pneg %p160
        %p352 = pneg %p157
        %p353 = pneg %p186
        %p354 = pneg %p183
        %s355 = sand.u32 %s173, 1
        %s356 = scalar_lea.sflag [#allocation6], %s355
        %s357 = sand.u32 %s173, 1
        %s358 = scalar_lea.vmem [#allocation7], %s357
        %p359 = pneg %p212
        %p360 = pneg %p209
        %s361 = sand.u32 %s199, 1
        %s362 = scalar_lea.sflag [#allocation9], %s361
        %s363 = sand.u32 %s199, 1
        %s364 = smul.addr %s363, 32
        %s365 = scalar_lea.vmem [#allocation8], %s364
        %v366 = vld [vmem:[%s2] sm:$0xff]
        %v367 = vld [vmem:[%s2 + $0x8] sm:$0xff]
        %v368 = vld [vmem:[%s2 + $0x10] sm:$0xff]
        %v369 = vld [vmem:[%s2 + $0x18] sm:$0xff]
        %v370 = vld [vmem:[%s319] sm:$0xff]
        %v371 = vld [vmem:[%s319 + $0x8] sm:$0xff]
        %v372 = vld [vmem:[%s3] sm:$0xff]
        %v373 = vld [vmem:[%s3 + $0x8] sm:$0xff]
        %v374 = vld [vmem:[%s3 + $0x10] sm:$0xff]
        %v375 = vld [vmem:[%s3 + $0x18] sm:$0xff]
        %377 = vset.pattern.permute.xlu0 0
        %378 = vperm.xlu0 %377, %v372
        %v379 = vpop.permute.xlu0 %378
        %382 = vset.pattern.permute.xlu0 0
        %383 = vperm.xlu0 %382, %v373
        %v384 = vpop.permute.xlu0 %383
        %387 = vset.pattern.permute.xlu0 0
        %388 = vperm.xlu0 %387, %v374
        %v389 = vpop.permute.xlu0 %388
        %392 = vset.pattern.permute.xlu0 0
        %393 = vperm.xlu0 %392, %v375
        %v394 = vpop.permute.xlu0 %393
        %vm396 = vcmask 130048
        %v398 = vsel %vm396, %v366, 0
        %v401 = vsel %vm396, %v367, 0
        %v404 = vsel %vm396, %v368, 0
        %v407 = vsel %vm396, %v369, 0
        %409 = vmatprep.subr.mxu0 0.0
        %410 = vmatpush1.msra.mxu0 0.0
        %411 = vmatprep.subr.mxu0 0.0
        %412 = vmatpush1.msra.mxu0 0.0
        %413 = vmatprep.subr.mxu0 0.0
        %414 = vmatpush1.msra.mxu0 0.0
        %415 = vmatprep.subr.mxu0 0.0
        %416 = vmatpush1.msra.mxu0 0.0
        %417 = vmatprep.subr.mxu0 0.0
        %418 = vmatpush1.msra.mxu0 0.0
        %419 = vmatprep.subr.mxu0 0.0
        %420 = vmatpush1.msra.mxu0 0.0
        %421 = vmatprep.subr.mxu0 0.0
        %422 = vmatpush1.msra.mxu0 0.0
        %423 = vmatprep.subr.mxu0 0.0
        %424 = vmatpush1.msra.mxu0 0.0
        %425 = vmatprep.subr.mxu0 0.0
        %426 = vmatpush1.msra.mxu0 0.0
        %427 = vmatprep.subr.mxu0 0.0
        %428 = vmatpush1.msra.mxu0 0.0
        %429 = vmatprep.subr.mxu0 0.0
        %430 = vmatpush1.msra.mxu0 0.0
        %431 = vmatprep.subr.mxu0 0.0
        %432 = vmatpush1.msra.mxu0 0.0
        %433 = vmatprep.subr.mxu0 0.0
        %434 = vmatpush1.msra.mxu0 0.0
        %435 = vmatprep.subr.mxu0 0.0
        %436 = vmatpush1.msra.mxu0 0.0
        %437 = vmatprep.subr.mxu0 0.0
        %438 = vmatpush1.msra.mxu0 %v371
        %439 = vmatprep.subr.mxu0 0.0
        %440 = vmatpush1.msra.mxu0 %v370
        %441 = vmatprep.subr.mxu0 0.0
        %442 = vmatpush2.msra.mxu0 0.0
        %443 = vmatprep.subr.mxu0 0.0
        %444 = vmatpush2.msra.mxu0 0.0
        %445 = vmatprep.subr.mxu0 0.0
        %446 = vmatpush2.msra.mxu0 0.0
        %447 = vmatprep.subr.mxu0 0.0
        %448 = vmatpush2.msra.mxu0 0.0
        %449 = vmatprep.subr.mxu0 0.0
        %450 = vmatpush2.msra.mxu0 0.0
        %451 = vmatprep.subr.mxu0 0.0
        %452 = vmatpush2.msra.mxu0 0.0
        %453 = vmatprep.subr.mxu0 0.0
        %454 = vmatpush2.msra.mxu0 0.0
        %455 = vmatprep.subr.mxu0 0.0
        %456 = vmatpush2.msra.mxu0 0.0
        %457 = vmatprep.subr.mxu0 0.0
        %458 = vmatpush2.msra.mxu0 0.0
        %459 = vmatprep.subr.mxu0 0.0
        %460 = vmatpush2.msra.mxu0 0.0
        %461 = vmatprep.subr.mxu0 0.0
        %462 = vmatpush2.msra.mxu0 0.0
        %463 = vmatprep.subr.mxu0 0.0
        %464 = vmatpush2.msra.mxu0 0.0
        %465 = vmatprep.subr.mxu0 0.0
        %466 = vmatpush2.msra.mxu0 0.0
        %467 = vmatprep.subr.mxu0 0.0
        %468 = vmatpush2.msra.mxu0 0.0
        %469 = vmatprep.subr.mxu0 0.0
        %470 = vmatpush2.msra.mxu0 0.0
        %471 = vmatprep.subr.mxu0 0.0
        %472 = vmatpush2.msra.mxu0 0.0
        %473 = vmatprep.mubr.f32.mxu0 0.0
        %474 = vmatmul.mubr.f32.gmra.mxu0 %v398
        %v475 = vpop.f32.mrf.mxu0
        %v476 = vadd.f32 %v379, %v475
        %v477 = vpop.f32.mrf.mxu0
        %478 = vmatprep.mubr.f32.mxu0 0.0
        %479 = vmatmul.mubr.f32.gmra.mxu0 %v401
        %v480 = vpop.f32.mrf.mxu0
        %v481 = vadd.f32 %v384, %v480
        %v482 = vpop.f32.mrf.mxu0
        %483 = vmatprep.mubr.f32.mxu0 0.0
        %484 = vmatmul.mubr.f32.gmra.mxu0 %v404
        %v485 = vpop.f32.mrf.mxu0
        %v486 = vadd.f32 %v389, %v485
        %v487 = vpop.f32.mrf.mxu0
        %488 = vmatprep.mubr.f32.mxu0 0.0
        %489 = vmatmul.mubr.f32.gmra.mxu0 %v407
        %v490 = vpop.f32.mrf.mxu0
        %v491 = vadd.f32 %v394, %v490
        %v492 = vpop.f32.mrf.mxu0
        %493 = vdwg.mxu0
        %494 = vst [vmem:[%s365] sm:$0xff] %v476
        %495 = vst [vmem:[%s365 + $0x8] sm:$0xff] %v481
        %496 = vst [vmem:[%s365 + $0x10] sm:$0xff] %v486
        %497 = vst [vmem:[%s365 + $0x18] sm:$0xff] %v491
        %v498 = vld [vmem:[%s327] sm:$0xff]
        %v499 = vld [vmem:[%s327 + $0x8] sm:$0xff]
        %v500 = vld [vmem:[%s327 + $0x10] sm:$0xff]
        %v501 = vld [vmem:[%s327 + $0x18] sm:$0xff]
        %v502 = vadd.f32 %v476, %v498
        %v503 = vadd.f32 %v481, %v499
        %v504 = vadd.f32 %v486, %v500
        %v505 = vadd.f32 %v491, %v501
        %v506 = vld [vmem:[%s4] sm:$0x1]
        %s507 = sld [smem:[#allocation2]]
        %v508 = vstv %s507
        %vm509 = vcmask 261120
        %v511 = vsel %vm509, %v506, 0
        %513 = vmatprep.subr.mxu0 0.0
        %514 = vmatpush1.msra.mxu0 0.0
        %515 = vmatprep.subr.mxu0 0.0
        %516 = vmatpush1.msra.mxu0 0.0
        %517 = vmatprep.subr.mxu0 0.0
        %518 = vmatpush1.msra.mxu0 0.0
        %519 = vmatprep.subr.mxu0 0.0
        %520 = vmatpush1.msra.mxu0 0.0
        %521 = vmatprep.subr.mxu0 0.0
        %522 = vmatpush1.msra.mxu0 0.0
        %523 = vmatprep.subr.mxu0 0.0
        %524 = vmatpush1.msra.mxu0 0.0
        %525 = vmatprep.subr.mxu0 0.0
        %526 = vmatpush1.msra.mxu0 0.0
        %527 = vmatprep.subr.mxu0 0.0
        %528 = vmatpush1.msra.mxu0 0.0
        %529 = vmatprep.subr.mxu0 0.0
        %530 = vmatpush1.msra.mxu0 0.0
        %531 = vmatprep.subr.mxu0 0.0
        %532 = vmatpush1.msra.mxu0 0.0
        %533 = vmatprep.subr.mxu0 0.0
        %534 = vmatpush1.msra.mxu0 0.0
        %535 = vmatprep.subr.mxu0 0.0
        %536 = vmatpush1.msra.mxu0 0.0
        %537 = vmatprep.subr.mxu0 0.0
        %538 = vmatpush1.msra.mxu0 %v505
        %539 = vmatprep.subr.mxu0 0.0
        %540 = vmatpush1.msra.mxu0 %v504
        %541 = vmatprep.subr.mxu0 0.0
        %542 = vmatpush1.msra.mxu0 %v503
        %543 = vmatprep.subr.mxu0 0.0
        %544 = vmatpush1.msra.mxu0 %v502
        %545 = vmatprep.subr.mxu0 0.0
        %546 = vmatpush2.msra.mxu0 0.0
        %547 = vmatprep.subr.mxu0 0.0
        %548 = vmatpush2.msra.mxu0 0.0
        %549 = vmatprep.subr.mxu0 0.0
        %550 = vmatpush2.msra.mxu0 0.0
        %551 = vmatprep.subr.mxu0 0.0
        %552 = vmatpush2.msra.mxu0 0.0
        %553 = vmatprep.subr.mxu0 0.0
        %554 = vmatpush2.msra.mxu0 0.0
        %555 = vmatprep.subr.mxu0 0.0
        %556 = vmatpush2.msra.mxu0 0.0
        %557 = vmatprep.subr.mxu0 0.0
        %558 = vmatpush2.msra.mxu0 0.0
        %559 = vmatprep.subr.mxu0 0.0
        %560 = vmatpush2.msra.mxu0 0.0
        %561 = vmatprep.subr.mxu0 0.0
        %562 = vmatpush2.msra.mxu0 0.0
        %563 = vmatprep.subr.mxu0 0.0
        %564 = vmatpush2.msra.mxu0 0.0
        %565 = vmatprep.subr.mxu0 0.0
        %566 = vmatpush2.msra.mxu0 0.0
        %567 = vmatprep.subr.mxu0 0.0
        %568 = vmatpush2.msra.mxu0 0.0
        %569 = vmatprep.subr.mxu0 0.0
        %570 = vmatpush2.msra.mxu0 0.0
        %571 = vmatprep.subr.mxu0 0.0
        %572 = vmatpush2.msra.mxu0 0.0
        %573 = vmatprep.subr.mxu0 0.0
        %574 = vmatpush2.msra.mxu0 0.0
        %575 = vmatprep.subr.mxu0 0.0
        %576 = vmatpush2.msra.mxu0 0.0
        %577 = vmatprep.mubr.f32.mxu0 0.0
        %578 = vmatmul.mubr.f32.gmra.mxu0 %v511
        %v579 = vpop.f32.mrf.mxu0
        %v580 = vadd.f32 %v508, %v579
        %v581 = vpop.f32.mrf.mxu0
        %582 = vdwg.mxu0
        %583 = vst [vmem:[%s358] sm:$0x1] %v580
        %s584 = sand.u32 %s173, 1
        %s585 = scalar_lea.sflag [#allocation6], %s584
        %s586 = sand.u32 %s173, 1
        %s587 = scalar_lea.vmem [#allocation7], %s586
        %s588 = sand.u32 %s199, 1
        %s589 = scalar_lea.sflag [#allocation9], %s588
        %s590 = sand.u32 %s199, 1
        %s591 = smul.addr %s590, 32
        %s592 = scalar_lea.vmem [#allocation8], %s591
        // Predicated region
        $region87: #{tpu_custom_call.1} parent=77 // pred_check
          %p593 = pneg %p183
        $region88: #{tpu_custom_call.1} parent=77 // pred_check_branch
          %595 = sbr.rel (%p593) target = $region90
        $region89: #{tpu_custom_call.1} parent=77 // pred_region
          %s597 = ssub.s32 16, 16
          %598 = vsyncadd %s585, %s597
          %s599 = smul.addr %s29, 16
          %s600 = scalar_lea.hbm %s6, %s599
          %s602 = sshll.u32 %s587, 4
          %s603 = int_to_ptr.vmem [resolvable:$true] %s602
          %605 = dma.vmem_to_hbm [thread:$0]  %s603, 16, %s600, %s585
        $region90: #{tpu_custom_call.1} parent=77 // pred_fallthru
          _
        // Predicated region
        $region91: #{tpu_custom_call.1} parent=77 // pred_check
          %p606 = pneg %p209
        $region92: #{tpu_custom_call.1} parent=77 // pred_check_branch
          %608 = sbr.rel (%p606) target = $region94
        $region93: #{tpu_custom_call.1} parent=77 // pred_region
          %s610 = ssub.s32 512, 512
          %611 = vsyncadd %s589, %s610
          %s612 = smul.addr %s29, 128
          %s613 = scalar_lea.hbm %s7, %s612
          %s614 = sshll.u32 %s592, 4
          %s615 = int_to_ptr.vmem [resolvable:$true] %s614
          %620 = dma.vmem_to_hbm [thread:$0]  %s615, 512, %s613, %s589, 128, 384, 8
        $region94: #{tpu_custom_call.1} parent=77 // pred_fallthru
          _
      $region78: #{tpu_custom_call.1} parent=5 // pred_fallthru
        _
      %p621 = scmp.le.s32.totalorder 2, %s24
      // Predicated region
      $region95: #{tpu_custom_call.1} parent=5 // pred_check
        %p622 = pneg %p621
      $region96: #{tpu_custom_call.1} parent=5 // pred_check_branch
        %624 = sbr.rel (%p622) target = $region98
      $region97: #{tpu_custom_call.1} parent=5 // pred_region
        %s625 = ssub.s32 %s24, 2
        // Predicated region
        $region99: #{tpu_custom_call.1} parent=97 // pred_check
          %p626 = pneg %p189
        $region100: #{tpu_custom_call.1} parent=97 // pred_check_branch
          %628 = sbr.rel (%p626) target = $region102
        $region101: #{tpu_custom_call.1} parent=97 // pred_region
          %s629 = sand.u32 %s174, 1
          %s630 = scalar_lea.sflag [#allocation6], %s629
          %s631 = sand.u32 %s174, 1
          %s632 = scalar_lea.vmem [#allocation7], %s631
          %633 = dma.done %s630, 16
        $region102: #{tpu_custom_call.1} parent=97 // pred_fallthru
          _
        // Predicated region
        $region103: #{tpu_custom_call.1} parent=97 // pred_check
          %p634 = pneg %p215
        $region104: #{tpu_custom_call.1} parent=97 // pred_check_branch
          %636 = sbr.rel (%p634) target = $region106
        $region105: #{tpu_custom_call.1} parent=97 // pred_region
          %s637 = sand.u32 %s200, 1
          %s638 = scalar_lea.sflag [#allocation9], %s637
          %s639 = sand.u32 %s200, 1
          %s640 = smul.addr %s639, 32
          %s641 = scalar_lea.vmem [#allocation8], %s640
          %642 = dma.done %s638, 512
        $region106: #{tpu_custom_call.1} parent=97 // pred_fallthru
          _
      $region98: #{tpu_custom_call.1} parent=5 // pred_fallthru
        _
    $region6: #{tpu_custom_call.1} parent=1 // loop_footer
      %s28 = sadd.s32 1, %s24
    $region7: #{tpu_custom_call.1} parent=1 // loop_footer_branch
      %23 = sbr.rel target = $region3
    $region8: #{tpu_custom_call.1} parent=1 // loop_exit
      _
    %643 = vsyncpa [#allocation5], 1
    %s644 = scalar_lea.sflag [#allocation5], 1
    %645 = vsyncpa %s644, 1
    %646 = vsyncpa [#allocation6], 1
    %s647 = scalar_lea.sflag [#allocation6], 1
    %648 = vsyncpa %s647, 1
    %649 = vsyncpa [#allocation9], 1
    %s650 = scalar_lea.sflag [#allocation9], 1
    %651 = vsyncpa %s650, 1

</llo_original>
